<compile_context>
chip_gen: v7x
topology: tpu7x:2x2x1
jax: 0.10.0
libtpu: 0.0.40
codegen_flags: <defaults>
</compile_context>

<pallas_src>
import functools

import jax
import jax.numpy as jnp
from jax.experimental import pallas as pl
from jax.experimental.pallas import tpu as pltpu


# ------------------------------------------------------------------ kernel
def _conv1_gap_kernel(x_ref, wc_ref, o_ref, *, Ho, na, inv_m):
    # x_ref : (B, Hq, Wq*P)    bf16 -- BN-applied, zero-padded, stride-2 space-to-depth
    #                                  input with (Wq, rh, rw, C) merged into a
    #                                  lane-dense minor dim.
    # wc_ref: (na, Wq*P, OCp)  f32  -- conv1 weights with the kw-window selection folded
    #                                  in (row order (wq, rh, rw, c), cols zero-padded
    #                                  64->128 for lane-dense output).
    # o_ref : (B, OCp)         f32  -- global-average-pooled conv1 features.
    x = x_ref[...].astype(jnp.float32)                       # one lane-dense upcast pass
    acc = None
    for a in range(na):                                      # 4 unrolled kh-window sums
        r = jnp.sum(x[:, a:a + Ho, :], axis=1)               # (B, Wq*P) f32 VPU reduce
        part = jnp.dot(r, wc_ref[a], preferred_element_type=jnp.float32)  # tiny MXU
        acc = part if acc is None else acc + part
    o_ref[...] = acc * inv_m                                 # fused global-average pool


# ------------------------------------------------------------------ wrapper
def conv1_gap(x_bn, conv_w, *, stride=2, pad=3, oc_pad=128, max_imgs_per_step=8):
    """Conv2d(C,O,7,stride=2,pad=3,bias=False) + global average pool, one Pallas kernel.

    Exploits that the (bias-free, linear) conv commutes with the global-average pool:
    pooled = (colsum of the im2col matrix) @ W / (Ho*Wo).  Exact vs. the reference.

    x_bn   : (N, C, H, W) f32 with BatchNorm already applied (pre-padding).
    conv_w : (O, C, kh, kw) f32 PyTorch-layout conv weights.
    Returns (N, O) f32 pooled conv features.
    """
    N, C, H, W = x_bn.shape
    O, _, kh, kw = conv_w.shape
    s = stride
    assert (H + 2 * pad) % s == 0 and (W + 2 * pad) % s == 0
    Hp, Wp = H + 2 * pad, W + 2 * pad
    Hq, Wq = Hp // s, Wp // s
    Ho = (Hp - kh) // s + 1
    Wo = (Wp - kw) // s + 1
    na, nb = -(-kh // s), -(-kw // s)                # row/col shifted-window counts (4, 4)
    assert Ho + (na - 1) <= Hq and Wo + (nb - 1) <= Wq
    P = s * s * C                                    # space-to-depth channels (8)
    Z = Wq * P                                       # merged lane-dense minor dim
    OCp = max(oc_pad, O)                             # lane-dense padded output channels

    # ---- host prep (cheap XLA, ~1x input bytes): zero-pad, stride-s space-to-depth,
    # merge (Wq, rh, rw, C) into one lane-dense minor dim, cast to bf16 (halves DMA).
    xp = jnp.pad(x_bn, ((0, 0), (0, 0), (pad, pad), (pad, pad)))
    xpatch = xp.reshape(N, C, Hq, s, Wq, s).transpose(0, 2, 4, 3, 5, 1)   # (N,Hq,Wq,rh,rw,C)
    xpatch = xpatch.reshape(N, Hq, Z).astype(jnp.bfloat16)

    # ---- weights: (O,C,7,7) -> (na, nb, P, OCp) with taps ordered (a,b,rh,rw,c) exactly
    # matching the space-to-depth packing; taps beyond 7x7 and channels 64->128 are zero.
    wpad = jnp.pad(conv_w, ((0, 0), (0, 0), (0, na * s - kh), (0, nb * s - kw)))
    wmat = wpad.reshape(O, C, na, s, nb, s).transpose(2, 4, 3, 5, 1, 0).reshape(na, nb, P, O)
    wmat = jnp.pad(wmat, ((0, 0), (0, 0), (0, 0), (0, OCp - O))).astype(jnp.float32)

    # Fold the kw-window (b) selection into the weights:
    #   wc[a, j*P + p, o] = sum_b [b <= j < b+Wo] * wmat[a, b, p, o]
    # so that  pooled = (1/M) * sum_a rowsum_a @ wc[a]   with
    #   rowsum_a[n, j*P + p] = sum_{i in [0,Ho)} xpatch[n, a+i, j, p].
    j = jnp.arange(Wq)
    b = jnp.arange(nb)
    sel = ((j[None, :] >= b[:, None]) & (j[None, :] < b[:, None] + Wo)).astype(jnp.float32)
    wc = jnp.einsum('abpo,bj->ajpo', wmat, sel).reshape(na, Z, OCp)       # (na, Wq*P, OCp)

    # ---- block several images per grid step (amortize per-step overhead; keep a grid
    # for megacore sharding when N is large).  Pad N so every block is full.
    B_blk = N if N <= max_imgs_per_step else max_imgs_per_step
    N_pad = -(-N // B_blk) * B_blk
    if N_pad != N:
        xpatch = jnp.pad(xpatch, ((0, N_pad - N), (0, 0), (0, 0)))

    kernel = functools.partial(_conv1_gap_kernel, Ho=Ho, na=na, inv_m=1.0 / (Ho * Wo))
    pooled = pl.pallas_call(
        kernel,
        out_shape=jax.ShapeDtypeStruct((N_pad, OCp), jnp.float32),
        grid=(N_pad // B_blk,),
        in_specs=[pl.BlockSpec((B_blk, Hq, Z), lambda n: (n, 0, 0)),
                  pl.BlockSpec((na, Z, OCp), lambda n: (0, 0, 0))],   # weights stay resident
        out_specs=pl.BlockSpec((B_blk, OCp), lambda n: (n, 0)),
        compiler_params=pltpu.CompilerParams(
            dimension_semantics=("parallel",)),                       # megacore over blocks
    )(xpatch, wc)
    return pooled[:N, :O]


def model_forward(x, params, eps=1e-5):
    """Equivalent of Model.forward for representation='mv' (eval-mode BatchNorm)."""
    C, H, W = x.shape[-3:]
    x = x.reshape((-1, C, H, W))                     # input.view((-1,) + size()[-3:])

    # data_bn = nn.BatchNorm2d(C): inference affine fused into the XLA-side prep
    # (applied before zero padding so the padded border stays exact).
    scale = params["bn_gamma"] / jnp.sqrt(params["bn_var"] + eps)
    shift = params["bn_beta"] - params["bn_mean"] * scale
    x_bn = x * scale[None, :, None, None] + shift[None, :, None, None]

    # conv1 (7x7, stride 2, pad 3, no bias) + fused global average pool (one kernel).
    feats = conv1_gap(x_bn, params["conv1_w"])       # (N, 64) f32

    # TODO(synk): full resnet152 / Vim trunk omitted; conv1 features go straight to head.

    # base_model.head = nn.Linear(feature_dim, num_class): tiny, plain jnp.
    return feats @ params["head_w"].T + params["head_b"]


# ------------------------------------------------------------------ reference
def reference_forward(x, params, eps=1e-5):
    C, H, W = x.shape[-3:]
    x = x.reshape((-1, C, H, W))
    scale = params["bn_gamma"] / jnp.sqrt(params["bn_var"] + eps)
    shift = params["bn_beta"] - params["bn_mean"] * scale
    x = x * scale[None, :, None, None] + shift[None, :, None, None]
    conv = jax.lax.conv_general_dilated(
        x, params["conv1_w"], window_strides=(2, 2), padding=[(3, 3), (3, 3)],
        dimension_numbers=("NCHW", "OIHW", "NCHW"))
    feat = conv.mean(axis=(2, 3))                    # (N, 64)
    return feat @ params["head_w"].T + params["head_b"]


# ------------------------------------------------------------------ main
if __name__ == "__main__":
    key = jax.random.PRNGKey(0)
    batch, num_segments = 2, 2
    C, H, W = 2, 16, 16                              # 'mv' representation: 2 channels
    num_class, feature_dim = 10, 64                  # synthetic head over conv1 features

    ks = jax.random.split(key, 8)
    x = jax.random.normal(ks[0], (batch, num_segments, C, H, W), jnp.float32)
    params = {
        "bn_gamma": jax.random.normal(ks[1], (C,), jnp.float32) * 0.1 + 1.0,
        "bn_beta":  jax.random.normal(ks[2], (C,), jnp.float32) * 0.1,
        "bn_mean":  jax.random.normal(ks[3], (C,), jnp.float32) * 0.1,
        "bn_var":   jax.nn.softplus(jax.random.normal(ks[4], (C,), jnp.float32)) + 0.5,
        "conv1_w":  jax.random.normal(ks[5], (64, C, 7, 7), jnp.float32) * 0.05,
        "head_w":   jax.random.normal(ks[6], (num_class, feature_dim), jnp.float32) * 0.05,
        "head_b":   jax.random.normal(ks[7], (num_class,), jnp.float32) * 0.01,
    }

    out = jax.block_until_ready(model_forward(x, params))
    ref = jax.block_until_ready(reference_forward(x, params))
    assert out.shape == (batch * num_segments, num_class), out.shape
    assert jnp.allclose(out, ref, rtol=1e-2, atol=1e-2), float(jnp.abs(out - ref).max())
    print("KERNEL_OK")
</pallas_src>

<mosaic_0001>
module attributes {stable_mosaic.version = 11 : i64} {
  func.func @_conv1_gap_kernel(%arg0: i32, %arg1: memref<4x11x88xbf16, #tpu.memory_space<vmem>>, %arg2: memref<4x88x128xf32, #tpu.memory_space<vmem>>, %arg3: memref<4x128xf32, #tpu.memory_space<vmem>>) attributes {dimension_semantics = [#tpu.dimension_semantics<parallel>], iteration_bounds = array<i64: 1>, scalar_prefetch = 0 : i64, scratch_operands = 0 : i64, tpu.core_type = #tpu.core_type<tc>, window_params = [{transform_indices = @transform_0, window_bounds = array<i64: 4, 11, 88>}, {pipeline_mode = #tpu.pipeline_mode<synchronous>, transform_indices = @transform_1, window_bounds = array<i64: 4, 88, 128>}, {transform_indices = @transform_2, window_bounds = array<i64: 4, 128>}]} {
    %c0 = arith.constant 0 : index
    %c0_0 = arith.constant 0 : index
    %c0_1 = arith.constant 0 : index
    %0 = vector.load %arg1[%c0, %c0_0, %c0_1] : memref<4x11x88xbf16, #tpu.memory_space<vmem>>, vector<4x11x88xbf16>
    %1 = arith.extf %0 : vector<4x11x88xbf16> to vector<4x11x88xf32>
    %2 = vector.extract_strided_slice %1 {offsets = [0, 0, 0], sizes = [4, 8, 88], strides = [1, 1, 1]} : vector<4x11x88xf32> to vector<4x8x88xf32>
    %cst = arith.constant dense<0.000000e+00> : vector<4x88xf32>
    %3 = vector.multi_reduction <add>, %2, %cst [1] : vector<4x8x88xf32> to vector<4x88xf32>
    %c0_2 = arith.constant 0 : index
    %c0_3 = arith.constant 0 : index
    %c0_4 = arith.constant 0 : index
    %4 = vector.load %arg2[%c0_2, %c0_3, %c0_4] : memref<4x88x128xf32, #tpu.memory_space<vmem>>, vector<1x88x128xf32>
    %5 = vector.shape_cast %4 : vector<1x88x128xf32> to vector<88x128xf32>
    %cst_5 = arith.constant dense<0.000000e+00> : vector<4x128xf32>
    %6 = tpu.matmul %3, %5, %cst_5 {dimension_numbers = #tpu.dot_dimension_numbers<[1], [0], [0], [1], [0, 0, 1, 1], [], []>} : vector<4x88xf32>, vector<88x128xf32>, vector<4x128xf32> -> vector<4x128xf32>
    %7 = vector.extract_strided_slice %1 {offsets = [0, 1, 0], sizes = [4, 8, 88], strides = [1, 1, 1]} : vector<4x11x88xf32> to vector<4x8x88xf32>
    %cst_6 = arith.constant dense<0.000000e+00> : vector<4x88xf32>
    %8 = vector.multi_reduction <add>, %7, %cst_6 [1] : vector<4x8x88xf32> to vector<4x88xf32>
    %c1 = arith.constant 1 : index
    %c0_7 = arith.constant 0 : index
    %c0_8 = arith.constant 0 : index
    %9 = vector.load %arg2[%c1, %c0_7, %c0_8] : memref<4x88x128xf32, #tpu.memory_space<vmem>>, vector<1x88x128xf32>
    %10 = vector.shape_cast %9 : vector<1x88x128xf32> to vector<88x128xf32>
    %cst_9 = arith.constant dense<0.000000e+00> : vector<4x128xf32>
    %11 = tpu.matmul %8, %10, %cst_9 {dimension_numbers = #tpu.dot_dimension_numbers<[1], [0], [0], [1], [0, 0, 1, 1], [], []>} : vector<4x88xf32>, vector<88x128xf32>, vector<4x128xf32> -> vector<4x128xf32>
    %12 = arith.addf %6, %11 : vector<4x128xf32>
    %13 = vector.extract_strided_slice %1 {offsets = [0, 2, 0], sizes = [4, 8, 88], strides = [1, 1, 1]} : vector<4x11x88xf32> to vector<4x8x88xf32>
    %cst_10 = arith.constant dense<0.000000e+00> : vector<4x88xf32>
    %14 = vector.multi_reduction <add>, %13, %cst_10 [1] : vector<4x8x88xf32> to vector<4x88xf32>
    %c2 = arith.constant 2 : index
    %c0_11 = arith.constant 0 : index
    %c0_12 = arith.constant 0 : index
    %15 = vector.load %arg2[%c2, %c0_11, %c0_12] : memref<4x88x128xf32, #tpu.memory_space<vmem>>, vector<1x88x128xf32>
    %16 = vector.shape_cast %15 : vector<1x88x128xf32> to vector<88x128xf32>
    %cst_13 = arith.constant dense<0.000000e+00> : vector<4x128xf32>
    %17 = tpu.matmul %14, %16, %cst_13 {dimension_numbers = #tpu.dot_dimension_numbers<[1], [0], [0], [1], [0, 0, 1, 1], [], []>} : vector<4x88xf32>, vector<88x128xf32>, vector<4x128xf32> -> vector<4x128xf32>
    %18 = arith.addf %12, %17 : vector<4x128xf32>
    %19 = vector.extract_strided_slice %1 {offsets = [0, 3, 0], sizes = [4, 8, 88], strides = [1, 1, 1]} : vector<4x11x88xf32> to vector<4x8x88xf32>
    %cst_14 = arith.constant dense<0.000000e+00> : vector<4x88xf32>
    %20 = vector.multi_reduction <add>, %19, %cst_14 [1] : vector<4x8x88xf32> to vector<4x88xf32>
    %c3 = arith.constant 3 : index
    %c0_15 = arith.constant 0 : index
    %c0_16 = arith.constant 0 : index
    %21 = vector.load %arg2[%c3, %c0_15, %c0_16] : memref<4x88x128xf32, #tpu.memory_space<vmem>>, vector<1x88x128xf32>
    %22 = vector.shape_cast %21 : vector<1x88x128xf32> to vector<88x128xf32>
    %cst_17 = arith.constant dense<0.000000e+00> : vector<4x128xf32>
    %23 = tpu.matmul %20, %22, %cst_17 {dimension_numbers = #tpu.dot_dimension_numbers<[1], [0], [0], [1], [0, 0, 1, 1], [], []>} : vector<4x88xf32>, vector<88x128xf32>, vector<4x128xf32> -> vector<4x128xf32>
    %24 = arith.addf %18, %23 : vector<4x128xf32>
    %cst_18 = arith.constant 1.562500e-02 : f32
    %25 = vector.broadcast %cst_18 : f32 to vector<4x128xf32>
    %26 = arith.mulf %24, %25 : vector<4x128xf32>
    %c0_19 = arith.constant 0 : index
    %c0_20 = arith.constant 0 : index
    %27 = vector.load %arg3[%c0_19, %c0_20] : memref<4x128xf32, #tpu.memory_space<vmem>>, vector<4x128xf32>
    tpu.vector_store %arg3[%c0_19, %c0_20], %26 {strides = array<i32>} : memref<4x128xf32, #tpu.memory_space<vmem>>, vector<4x128xf32>,
    return
  }
  func.func @transform_0(%arg0: i32) -> (i32, i32, i32) {
    %c0_i32 = arith.constant 0 : i32
    %c0_i32_0 = arith.constant 0 : i32
    %c0_i32_1 = arith.constant 0 : i32
    return %arg0, %c0_i32, %c0_i32_0 : i32, i32, i32
  }
  func.func @transform_1(%arg0: i32) -> (i32, i32, i32) {
    %c0_i32 = arith.constant 0 : i32
    %c0_i32_0 = arith.constant 0 : i32
    %c0_i32_1 = arith.constant 0 : i32
    %c0_i32_2 = arith.constant 0 : i32
    return %c0_i32, %c0_i32_0, %c0_i32_1 : i32, i32, i32
  }
  func.func @transform_2(%arg0: i32) -> (i32, i32) {
    %c0_i32 = arith.constant 0 : i32
    %c0_i32_0 = arith.constant 0 : i32
    return %arg0, %c0_i32 : i32, i32
  }
}

</mosaic_0001>

<llo_original>
// kernel: tpu_custom_call.1
$region0: #{tpu_custom_call.1}
  #allocation0 [shape = 'u32[]', space=smem, size = 0x4, offset = 0x4, fixed_abs, tag = 'smem constant byte address 0x4 - core index']
  #allocation1 [shape = 'u32[144,128]{1,0:T(1,128)}', space=vmem, size = 0x12000, scoped, tag = 'internal scratch']
  %s0 = inlined_call_operand.vmem [shape: bf16[4,11,88], index: 0, kind: input, shape index: {}]
  %s1 = inlined_call_operand.hbm [shape: f32[4,88,128], index: 1, kind: input, shape index: {}]
  %s2 = inlined_call_operand.hbm [shape: f32[4,128], index: 2, kind: output, shape index: {}]
  %s3 = sld [smem:[#allocation0]]
  $region22: #{tpu_custom_call.1} parent=0
    _
  %s5 = ssub.s32 1, %s3
  %s6 = scalar_select 0, %s5, %s3
  $region1: #{tpu_custom_call.1} parent=0
    #allocation2 [shape = 'u8[180224]{0}', space=vmem, size = 0x2c000, scoped, tag = 'input window, operand 1, single buffered']
    #allocation3 [shape = 's32[1]{0}', space=sflag, size = 0x4, scoped, tag = 'scoped memory for tpu_custom_call.1']
    #allocation4 [shape = 's32[1]{0}', space=sflag, size = 0x4, scoped, tag = 'scoped memory for tpu_custom_call.1']
    #allocation5 [shape = 'u8[2048]{0}', space=vmem, size = 0x800, scoped, tag = 'output window, operand 0, single buffered']
    %7 = vsyncpa [#allocation3], 0
    %8 = vsyncpa [#allocation4], 0
    // Predicated region
    $region2: #{tpu_custom_call.1} parent=1 // pred_check
      _
    $region3: #{tpu_custom_call.1} parent=1 // pred_check_branch
      %10 = sbr.rel (0) target = $region5
    $region4: #{tpu_custom_call.1} parent=1 // pred_region
      _
    $region5: #{tpu_custom_call.1} parent=1 // pred_fallthru
      _
    // Predicated region
    $region6: #{tpu_custom_call.1} parent=1 // pred_check
      _
    $region7: #{tpu_custom_call.1} parent=1 // pred_check_branch
      %12 = sbr.rel (0) target = $region9
    $region8: #{tpu_custom_call.1} parent=1 // pred_region
      %s14 = ssub.s32 5632, 5632
      %15 = vsyncadd [#allocation3], %s14
      %s16 = sshll.u32 [#allocation2], 4
      %s17 = int_to_ptr.vmem [resolvable:$true] %s16
      %22 = dma.hbm_to_vmem [thread:$0]  %s1, 5632, %s17, [#allocation3], 128, 128, 8
    $region9: #{tpu_custom_call.1} parent=1 // pred_fallthru
      _
    // Predicated region
    $region10: #{tpu_custom_call.1} parent=1 // pred_check
      _
    $region11: #{tpu_custom_call.1} parent=1 // pred_check_branch
      %24 = sbr.rel (0) target = $region13
    $region12: #{tpu_custom_call.1} parent=1 // pred_region
      %25 = dma.done [#allocation3], 5632
    $region13: #{tpu_custom_call.1} parent=1 // pred_fallthru
      _
    %v26 = vld [vmem:[%s0] sm:$0xf]
    %v27 = vld [vmem:[%s0 + $0x4] sm:$0x3]
    %v28 = vld [vmem:[%s0 + $0x8] sm:$0xf]
    %v29 = vld [vmem:[%s0 + $0xc] sm:$0x3]
    %v30 = vld [vmem:[%s0 + $0x10] sm:$0xf]
    %v31 = vld [vmem:[%s0 + $0x14] sm:$0x3]
    %v32 = vld [vmem:[%s0 + $0x18] sm:$0xf]
    %v33 = vld [vmem:[%s0 + $0x1c] sm:$0x3]
    %v34 = vunpack.c.l.bf16 %v26
    %v35 = vunpack.c.l.bf16 %v27
    %v36 = vunpack.c.l.bf16 %v28
    %v37 = vunpack.c.l.bf16 %v29
    %v38 = vunpack.c.l.bf16 %v30
    %v39 = vunpack.c.l.bf16 %v31
    %v40 = vunpack.c.l.bf16 %v32
    %v41 = vunpack.c.l.bf16 %v33
    %vm42 = vcmask 719872
    %v43 = vsel %vm42, %v34, 0.0
    %v44 = vrot.slane %v43, 4
    %v45 = vadd.f32 %v43, %v44
    %v46 = vrot.slane %v45, 2
    %v47 = vadd.f32 %v45, %v46
    %v48 = vrot.slane %v47, 1
    %v49 = vadd.f32 %v47, %v48
    %v50 = vsel %vm42, %v36, 0.0
    %v51 = vrot.slane %v50, 4
    %v52 = vadd.f32 %v50, %v51
    %v53 = vrot.slane %v52, 2
    %v54 = vadd.f32 %v52, %v53
    %v55 = vrot.slane %v54, 1
    %v56 = vadd.f32 %v54, %v55
    %v57 = vsel %vm42, %v38, 0.0
    %v58 = vrot.slane %v57, 4
    %v59 = vadd.f32 %v57, %v58
    %v60 = vrot.slane %v59, 2
    %v61 = vadd.f32 %v59, %v60
    %v62 = vrot.slane %v61, 1
    %v63 = vadd.f32 %v61, %v62
    %v64 = vsel %vm42, %v40, 0.0
    %v65 = vrot.slane %v64, 4
    %v66 = vadd.f32 %v64, %v65
    %v67 = vrot.slane %v66, 2
    %v68 = vadd.f32 %v66, %v67
    %v69 = vrot.slane %v68, 1
    %v70 = vadd.f32 %v68, %v69
    %v71 = vld [vmem:[#allocation2] sm:$0xff]
    %v72 = vld [vmem:[#allocation2 + $0x8] sm:$0xff]
    %v73 = vld [vmem:[#allocation2 + $0x10] sm:$0xff]
    %v74 = vld [vmem:[#allocation2 + $0x18] sm:$0xff]
    %v75 = vld [vmem:[#allocation2 + $0x20] sm:$0xff]
    %v76 = vld [vmem:[#allocation2 + $0x28] sm:$0xff]
    %v77 = vld [vmem:[#allocation2 + $0x30] sm:$0xff]
    %v78 = vld [vmem:[#allocation2 + $0x38] sm:$0xff]
    %v79 = vld [vmem:[#allocation2 + $0x40] sm:$0xff]
    %v80 = vld [vmem:[#allocation2 + $0x48] sm:$0xff]
    %v81 = vld [vmem:[#allocation2 + $0x50] sm:$0xff]
    %vm90 = vcmask 1046528
    %v91 = vrot.slane %v34, 1
    %v92 = vrot.slane %v35, 1
    %v93 = vsel %vm90, %v91, %v92
    %v94 = vrot.slane %v36, 1
    %v95 = vrot.slane %v37, 1
    %v96 = vsel %vm90, %v94, %v95
    %v97 = vrot.slane %v38, 1
    %v98 = vrot.slane %v39, 1
    %v99 = vsel %vm90, %v97, %v98
    %v100 = vrot.slane %v40, 1
    %v101 = vrot.slane %v41, 1
    %v102 = vsel %vm90, %v100, %v101
    %v107 = vsel %vm42, %v93, 0.0
    %v108 = vrot.slane %v107, 4
    %v109 = vadd.f32 %v107, %v108
    %v110 = vrot.slane %v109, 2
    %v111 = vadd.f32 %v109, %v110
    %v112 = vrot.slane %v111, 1
    %v113 = vadd.f32 %v111, %v112
    %v114 = vsel %vm42, %v96, 0.0
    %v115 = vrot.slane %v114, 4
    %v116 = vadd.f32 %v114, %v115
    %v117 = vrot.slane %v116, 2
    %v118 = vadd.f32 %v116, %v117
    %v119 = vrot.slane %v118, 1
    %v120 = vadd.f32 %v118, %v119
    %v121 = vsel %vm42, %v99, 0.0
    %v122 = vrot.slane %v121, 4
    %v123 = vadd.f32 %v121, %v122
    %v124 = vrot.slane %v123, 2
    %v125 = vadd.f32 %v123, %v124
    %v126 = vrot.slane %v125, 1
    %v127 = vadd.f32 %v125, %v126
    %v128 = vsel %vm42, %v102, 0.0
    %v129 = vrot.slane %v128, 4
    %v130 = vadd.f32 %v128, %v129
    %v131 = vrot.slane %v130, 2
    %v132 = vadd.f32 %v130, %v131
    %v133 = vrot.slane %v132, 1
    %v134 = vadd.f32 %v132, %v133
    %s135 = scalar_lea.vmem [#allocation2], 88
    %v136 = vld [vmem:[%s135] sm:$0xff]
    %v137 = vld [vmem:[%s135 + $0x8] sm:$0xff]
    %v138 = vld [vmem:[%s135 + $0x10] sm:$0xff]
    %v139 = vld [vmem:[%s135 + $0x18] sm:$0xff]
    %v140 = vld [vmem:[%s135 + $0x20] sm:$0xff]
    %v141 = vld [vmem:[%s135 + $0x28] sm:$0xff]
    %v142 = vld [vmem:[%s135 + $0x30] sm:$0xff]
    %v143 = vld [vmem:[%s135 + $0x38] sm:$0xff]
    %v144 = vld [vmem:[%s135 + $0x40] sm:$0xff]
    %v145 = vld [vmem:[%s135 + $0x48] sm:$0xff]
    %v146 = vld [vmem:[%s135 + $0x50] sm:$0xff]
    %vm151 = vcmask 1041409
    %v152 = vsel %vm151, %v120, %v113
    %vm153 = vcmask 1042434
    %v154 = vsel %vm153, %v127, %v152
    %vm155 = vcmask 1043459
    %v156 = vsel %vm155, %v134, %v154
    %v157 = vsel %vm42, %v156, 0
    %159 = vmatprep.subr.mxu0 0.0
    %160 = vmatpush1.msra.mxu0 %v136
    %161 = vmatprep.subr.mxu0 0.0
    %162 = vmatpush1.msra.mxu0 %v137
    %163 = vmatprep.subr.mxu0 0.0
    %164 = vmatpush1.msra.mxu0 %v138
    %165 = vmatprep.subr.mxu0 0.0
    %166 = vmatpush1.msra.mxu0 %v139
    %167 = vmatprep.subr.mxu0 0.0
    %168 = vmatpush1.msra.mxu0 %v140
    %169 = vmatprep.subr.mxu0 0.0
    %170 = vmatpush1.msra.mxu0 %v141
    %171 = vmatprep.subr.mxu0 0.0
    %172 = vmatpush1.msra.mxu0 %v142
    %173 = vmatprep.subr.mxu0 0.0
    %174 = vmatpush1.msra.mxu0 %v143
    %175 = vmatprep.subr.mxu0 0.0
    %176 = vmatpush1.msra.mxu0 %v144
    %177 = vmatprep.subr.mxu0 0.0
    %178 = vmatpush1.msra.mxu0 %v145
    %179 = vmatprep.subr.mxu0 0.0
    %180 = vmatpush1.msra.mxu0 %v146
    %181 = vmatprep.subr.mxu0 0.0
    %182 = vmatpush1.msra.mxu0 0.0
    %183 = vmatprep.subr.mxu0 0.0
    %184 = vmatpush1.msra.mxu0 0.0
    %185 = vmatprep.subr.mxu0 0.0
    %186 = vmatpush1.msra.mxu0 0.0
    %187 = vmatprep.subr.mxu0 0.0
    %188 = vmatpush1.msra.mxu0 0.0
    %189 = vmatprep.subr.mxu0 0.0
    %190 = vmatpush1.msra.mxu0 0.0
    %191 = vmatprep.subr.mxu0 0.0
    %192 = vmatpush1.msra.mxu0 0.0
    %193 = vmatprep.subr.mxu0 0.0
    %194 = vmatpush1.msra.mxu0 0.0
    %195 = vmatprep.subr.mxu0 0.0
    %196 = vmatpush1.msra.mxu0 0.0
    %197 = vmatprep.subr.mxu0 0.0
    %198 = vmatpush1.msra.mxu0 0.0
    %199 = vmatprep.subr.mxu0 0.0
    %200 = vmatpush1.msra.mxu0 0.0
    %201 = vmatprep.subr.mxu0 0.0
    %202 = vmatpush1.msra.mxu0 0.0
    %203 = vmatprep.subr.mxu0 0.0
    %204 = vmatpush1.msra.mxu0 0.0
    %205 = vmatprep.subr.mxu0 0.0
    %206 = vmatpush1.msra.mxu0 0.0
    %207 = vmatprep.subr.mxu0 0.0
    %208 = vmatpush1.msra.mxu0 0.0
    %209 = vmatprep.subr.mxu0 0.0
    %210 = vmatpush1.msra.mxu0 0.0
    %211 = vmatprep.subr.mxu0 0.0
    %212 = vmatpush1.msra.mxu0 0.0
    %213 = vmatprep.subr.mxu0 0.0
    %214 = vmatpush1.msra.mxu0 0.0
    %215 = vmatprep.subr.mxu0 0.0
    %216 = vmatpush1.msra.mxu0 0.0
    %217 = vmatprep.subr.mxu0 0.0
    %218 = vmatpush1.msra.mxu0 0.0
    %219 = vmatprep.subr.mxu0 0.0
    %220 = vmatpush1.msra.mxu0 0.0
    %221 = vmatprep.subr.mxu0 0.0
    %222 = vmatpush1.msra.mxu0 0.0
    %223 = vmatprep.mubr.f32.mxu0 0.0
    %224 = vmatmul.mubr.f32.gmra.mrb[0].mxu0 %v157
    %v225 = vpop.f32.mrb[0].mxu0
    %v226 = vadd.f32 0.0, %v225
    %v227 = vpop.f32.mrb[0].mxu0
    %228 = vdwg.mxu0
    %v233 = vsel %vm151, %v56, %v49
    %v234 = vsel %vm153, %v63, %v233
    %v235 = vsel %vm155, %v70, %v234
    %v236 = vsel %vm42, %v235, 0
    %238 = vmatprep.subr.mxu0 0.0
    %239 = vmatpush1.msra.mxu0 %v71
    %240 = vmatprep.subr.mxu0 0.0
    %241 = vmatpush1.msra.mxu0 %v72
    %242 = vmatprep.subr.mxu0 0.0
    %243 = vmatpush1.msra.mxu0 %v73
    %244 = vmatprep.subr.mxu0 0.0
    %245 = vmatpush1.msra.mxu0 %v74
    %246 = vmatprep.subr.mxu0 0.0
    %247 = vmatpush1.msra.mxu0 %v75
    %248 = vmatprep.subr.mxu0 0.0
    %249 = vmatpush1.msra.mxu0 %v76
    %250 = vmatprep.subr.mxu0 0.0
    %251 = vmatpush1.msra.mxu0 %v77
    %252 = vmatprep.subr.mxu0 0.0
    %253 = vmatpush1.msra.mxu0 %v78
    %254 = vmatprep.subr.mxu0 0.0
    %255 = vmatpush1.msra.mxu0 %v79
    %256 = vmatprep.subr.mxu0 0.0
    %257 = vmatpush1.msra.mxu0 %v80
    %258 = vmatprep.subr.mxu0 0.0
    %259 = vmatpush1.msra.mxu0 %v81
    %260 = vmatprep.subr.mxu0 0.0
    %261 = vmatpush1.msra.mxu0 0.0
    %262 = vmatprep.subr.mxu0 0.0
    %263 = vmatpush1.msra.mxu0 0.0
    %264 = vmatprep.subr.mxu0 0.0
    %265 = vmatpush1.msra.mxu0 0.0
    %266 = vmatprep.subr.mxu0 0.0
    %267 = vmatpush1.msra.mxu0 0.0
    %268 = vmatprep.subr.mxu0 0.0
    %269 = vmatpush1.msra.mxu0 0.0
    %270 = vmatprep.subr.mxu0 0.0
    %271 = vmatpush1.msra.mxu0 0.0
    %272 = vmatprep.subr.mxu0 0.0
    %273 = vmatpush1.msra.mxu0 0.0
    %274 = vmatprep.subr.mxu0 0.0
    %275 = vmatpush1.msra.mxu0 0.0
    %276 = vmatprep.subr.mxu0 0.0
    %277 = vmatpush1.msra.mxu0 0.0
    %278 = vmatprep.subr.mxu0 0.0
    %279 = vmatpush1.msra.mxu0 0.0
    %280 = vmatprep.subr.mxu0 0.0
    %281 = vmatpush1.msra.mxu0 0.0
    %282 = vmatprep.subr.mxu0 0.0
    %283 = vmatpush1.msra.mxu0 0.0
    %284 = vmatprep.subr.mxu0 0.0
    %285 = vmatpush1.msra.mxu0 0.0
    %286 = vmatprep.subr.mxu0 0.0
    %287 = vmatpush1.msra.mxu0 0.0
    %288 = vmatprep.subr.mxu0 0.0
    %289 = vmatpush1.msra.mxu0 0.0
    %290 = vmatprep.subr.mxu0 0.0
    %291 = vmatpush1.msra.mxu0 0.0
    %292 = vmatprep.subr.mxu0 0.0
    %293 = vmatpush1.msra.mxu0 0.0
    %294 = vmatprep.subr.mxu0 0.0
    %295 = vmatpush1.msra.mxu0 0.0
    %296 = vmatprep.subr.mxu0 0.0
    %297 = vmatpush1.msra.mxu0 0.0
    %298 = vmatprep.subr.mxu0 0.0
    %299 = vmatpush1.msra.mxu0 0.0
    %300 = vmatprep.subr.mxu0 0.0
    %301 = vmatpush1.msra.mxu0 0.0
    %302 = vmatprep.mubr.f32.mxu0 0.0
    %303 = vmatmul.mubr.f32.gmra.mrb[0].mxu0 %v236
    %v304 = vpop.f32.mrb[0].mxu0
    %v305 = vadd.f32 %v226, %v304
    %v306 = vpop.f32.mrb[0].mxu0
    %307 = vdwg.mxu0
    %vm308 = vcmask 1045504
    %v309 = vrot.slane %v34, 2
    %v310 = vrot.slane %v35, 2
    %v311 = vsel %vm308, %v309, %v310
    %v312 = vrot.slane %v36, 2
    %v313 = vrot.slane %v37, 2
    %v314 = vsel %vm308, %v312, %v313
    %v315 = vrot.slane %v38, 2
    %v316 = vrot.slane %v39, 2
    %v317 = vsel %vm308, %v315, %v316
    %v318 = vrot.slane %v40, 2
    %v319 = vrot.slane %v41, 2
    %v320 = vsel %vm308, %v318, %v319
    %v325 = vsel %vm42, %v311, 0.0
    %v326 = vrot.slane %v325, 4
    %v327 = vadd.f32 %v325, %v326
    %v328 = vrot.slane %v327, 2
    %v329 = vadd.f32 %v327, %v328
    %v330 = vrot.slane %v329, 1
    %v331 = vadd.f32 %v329, %v330
    %v332 = vsel %vm42, %v314, 0.0
    %v333 = vrot.slane %v332, 4
    %v334 = vadd.f32 %v332, %v333
    %v335 = vrot.slane %v334, 2
    %v336 = vadd.f32 %v334, %v335
    %v337 = vrot.slane %v336, 1
    %v338 = vadd.f32 %v336, %v337
    %v339 = vsel %vm42, %v317, 0.0
    %v340 = vrot.slane %v339, 4
    %v341 = vadd.f32 %v339, %v340
    %v342 = vrot.slane %v341, 2
    %v343 = vadd.f32 %v341, %v342
    %v344 = vrot.slane %v343, 1
    %v345 = vadd.f32 %v343, %v344
    %v346 = vsel %vm42, %v320, 0.0
    %v347 = vrot.slane %v346, 4
    %v348 = vadd.f32 %v346, %v347
    %v349 = vrot.slane %v348, 2
    %v350 = vadd.f32 %v348, %v349
    %v351 = vrot.slane %v350, 1
    %v352 = vadd.f32 %v350, %v351
    %s353 = scalar_lea.vmem [#allocation2], 176
    %v354 = vld [vmem:[%s353] sm:$0xff]
    %v355 = vld [vmem:[%s353 + $0x8] sm:$0xff]
    %v356 = vld [vmem:[%s353 + $0x10] sm:$0xff]
    %v357 = vld [vmem:[%s353 + $0x18] sm:$0xff]
    %v358 = vld [vmem:[%s353 + $0x20] sm:$0xff]
    %v359 = vld [vmem:[%s353 + $0x28] sm:$0xff]
    %v360 = vld [vmem:[%s353 + $0x30] sm:$0xff]
    %v361 = vld [vmem:[%s353 + $0x38] sm:$0xff]
    %v362 = vld [vmem:[%s353 + $0x40] sm:$0xff]
    %v363 = vld [vmem:[%s353 + $0x48] sm:$0xff]
    %v364 = vld [vmem:[%s353 + $0x50] sm:$0xff]
    %v369 = vsel %vm151, %v338, %v331
    %v370 = vsel %vm153, %v345, %v369
    %v371 = vsel %vm155, %v352, %v370
    %v372 = vsel %vm42, %v371, 0
    %374 = vmatprep.subr.mxu0 0.0
    %375 = vmatpush1.msra.mxu0 %v354
    %376 = vmatprep.subr.mxu0 0.0
    %377 = vmatpush1.msra.mxu0 %v355
    %378 = vmatprep.subr.mxu0 0.0
    %379 = vmatpush1.msra.mxu0 %v356
    %380 = vmatprep.subr.mxu0 0.0
    %381 = vmatpush1.msra.mxu0 %v357
    %382 = vmatprep.subr.mxu0 0.0
    %383 = vmatpush1.msra.mxu0 %v358
    %384 = vmatprep.subr.mxu0 0.0
    %385 = vmatpush1.msra.mxu0 %v359
    %386 = vmatprep.subr.mxu0 0.0
    %387 = vmatpush1.msra.mxu0 %v360
    %388 = vmatprep.subr.mxu0 0.0
    %389 = vmatpush1.msra.mxu0 %v361
    %390 = vmatprep.subr.mxu0 0.0
    %391 = vmatpush1.msra.mxu0 %v362
    %392 = vmatprep.subr.mxu0 0.0
    %393 = vmatpush1.msra.mxu0 %v363
    %394 = vmatprep.subr.mxu0 0.0
    %395 = vmatpush1.msra.mxu0 %v364
    %396 = vmatprep.subr.mxu0 0.0
    %397 = vmatpush1.msra.mxu0 0.0
    %398 = vmatprep.subr.mxu0 0.0
    %399 = vmatpush1.msra.mxu0 0.0
    %400 = vmatprep.subr.mxu0 0.0
    %401 = vmatpush1.msra.mxu0 0.0
    %402 = vmatprep.subr.mxu0 0.0
    %403 = vmatpush1.msra.mxu0 0.0
    %404 = vmatprep.subr.mxu0 0.0
    %405 = vmatpush1.msra.mxu0 0.0
    %406 = vmatprep.subr.mxu0 0.0
    %407 = vmatpush1.msra.mxu0 0.0
    %408 = vmatprep.subr.mxu0 0.0
    %409 = vmatpush1.msra.mxu0 0.0
    %410 = vmatprep.subr.mxu0 0.0
    %411 = vmatpush1.msra.mxu0 0.0
    %412 = vmatprep.subr.mxu0 0.0
    %413 = vmatpush1.msra.mxu0 0.0
    %414 = vmatprep.subr.mxu0 0.0
    %415 = vmatpush1.msra.mxu0 0.0
    %416 = vmatprep.subr.mxu0 0.0
    %417 = vmatpush1.msra.mxu0 0.0
    %418 = vmatprep.subr.mxu0 0.0
    %419 = vmatpush1.msra.mxu0 0.0
    %420 = vmatprep.subr.mxu0 0.0
    %421 = vmatpush1.msra.mxu0 0.0
    %422 = vmatprep.subr.mxu0 0.0
    %423 = vmatpush1.msra.mxu0 0.0
    %424 = vmatprep.subr.mxu0 0.0
    %425 = vmatpush1.msra.mxu0 0.0
    %426 = vmatprep.subr.mxu0 0.0
    %427 = vmatpush1.msra.mxu0 0.0
    %428 = vmatprep.subr.mxu0 0.0
    %429 = vmatpush1.msra.mxu0 0.0
    %430 = vmatprep.subr.mxu0 0.0
    %431 = vmatpush1.msra.mxu0 0.0
    %432 = vmatprep.subr.mxu0 0.0
    %433 = vmatpush1.msra.mxu0 0.0
    %434 = vmatprep.subr.mxu0 0.0
    %435 = vmatpush1.msra.mxu0 0.0
    %436 = vmatprep.subr.mxu0 0.0
    %437 = vmatpush1.msra.mxu0 0.0
    %438 = vmatprep.mubr.f32.mxu0 0.0
    %439 = vmatmul.mubr.f32.gmra.mrb[0].mxu0 %v372
    %v440 = vpop.f32.mrb[0].mxu0
    %v441 = vadd.f32 0.0, %v440
    %v442 = vpop.f32.mrb[0].mxu0
    %443 = vdwg.mxu0
    %v444 = vadd.f32 %v305, %v441
    %vm445 = vcmask 1044480
    %v446 = vrot.slane %v34, 3
    %v447 = vrot.slane %v35, 3
    %v448 = vsel %vm445, %v446, %v447
    %v449 = vrot.slane %v36, 3
    %v450 = vrot.slane %v37, 3
    %v451 = vsel %vm445, %v449, %v450
    %v452 = vrot.slane %v38, 3
    %v453 = vrot.slane %v39, 3
    %v454 = vsel %vm445, %v452, %v453
    %v455 = vrot.slane %v40, 3
    %v456 = vrot.slane %v41, 3
    %v457 = vsel %vm445, %v455, %v456
    %v462 = vsel %vm42, %v448, 0.0
    %v463 = vrot.slane %v462, 4
    %v464 = vadd.f32 %v462, %v463
    %v465 = vrot.slane %v464, 2
    %v466 = vadd.f32 %v464, %v465
    %v467 = vrot.slane %v466, 1
    %v468 = vadd.f32 %v466, %v467
    %v469 = vsel %vm42, %v451, 0.0
    %v470 = vrot.slane %v469, 4
    %v471 = vadd.f32 %v469, %v470
    %v472 = vrot.slane %v471, 2
    %v473 = vadd.f32 %v471, %v472
    %v474 = vrot.slane %v473, 1
    %v475 = vadd.f32 %v473, %v474
    %v476 = vsel %vm42, %v454, 0.0
    %v477 = vrot.slane %v476, 4
    %v478 = vadd.f32 %v476, %v477
    %v479 = vrot.slane %v478, 2
    %v480 = vadd.f32 %v478, %v479
    %v481 = vrot.slane %v480, 1
    %v482 = vadd.f32 %v480, %v481
    %v483 = vsel %vm42, %v457, 0.0
    %v484 = vrot.slane %v483, 4
    %v485 = vadd.f32 %v483, %v484
    %v486 = vrot.slane %v485, 2
    %v487 = vadd.f32 %v485, %v486
    %v488 = vrot.slane %v487, 1
    %v489 = vadd.f32 %v487, %v488
    %s490 = scalar_lea.vmem [#allocation2], 264
    %v491 = vld [vmem:[%s490] sm:$0xff]
    %v492 = vld [vmem:[%s490 + $0x8] sm:$0xff]
    %v493 = vld [vmem:[%s490 + $0x10] sm:$0xff]
    %v494 = vld [vmem:[%s490 + $0x18] sm:$0xff]
    %v495 = vld [vmem:[%s490 + $0x20] sm:$0xff]
    %v496 = vld [vmem:[%s490 + $0x28] sm:$0xff]
    %v497 = vld [vmem:[%s490 + $0x30] sm:$0xff]
    %v498 = vld [vmem:[%s490 + $0x38] sm:$0xff]
    %v499 = vld [vmem:[%s490 + $0x40] sm:$0xff]
    %v500 = vld [vmem:[%s490 + $0x48] sm:$0xff]
    %v501 = vld [vmem:[%s490 + $0x50] sm:$0xff]
    %v506 = vsel %vm151, %v475, %v468
    %v507 = vsel %vm153, %v482, %v506
    %v508 = vsel %vm155, %v489, %v507
    %v509 = vsel %vm42, %v508, 0
    %511 = vmatprep.subr.mxu0 0.0
    %512 = vmatpush1.msra.mxu0 %v491
    %513 = vmatprep.subr.mxu0 0.0
    %514 = vmatpush1.msra.mxu0 %v492
    %515 = vmatprep.subr.mxu0 0.0
    %516 = vmatpush1.msra.mxu0 %v493
    %517 = vmatprep.subr.mxu0 0.0
    %518 = vmatpush1.msra.mxu0 %v494
    %519 = vmatprep.subr.mxu0 0.0
    %520 = vmatpush1.msra.mxu0 %v495
    %521 = vmatprep.subr.mxu0 0.0
    %522 = vmatpush1.msra.mxu0 %v496
    %523 = vmatprep.subr.mxu0 0.0
    %524 = vmatpush1.msra.mxu0 %v497
    %525 = vmatprep.subr.mxu0 0.0
    %526 = vmatpush1.msra.mxu0 %v498
    %527 = vmatprep.subr.mxu0 0.0
    %528 = vmatpush1.msra.mxu0 %v499
    %529 = vmatprep.subr.mxu0 0.0
    %530 = vmatpush1.msra.mxu0 %v500
    %531 = vmatprep.subr.mxu0 0.0
    %532 = vmatpush1.msra.mxu0 %v501
    %533 = vmatprep.subr.mxu0 0.0
    %534 = vmatpush1.msra.mxu0 0.0
    %535 = vmatprep.subr.mxu0 0.0
    %536 = vmatpush1.msra.mxu0 0.0
    %537 = vmatprep.subr.mxu0 0.0
    %538 = vmatpush1.msra.mxu0 0.0
    %539 = vmatprep.subr.mxu0 0.0
    %540 = vmatpush1.msra.mxu0 0.0
    %541 = vmatprep.subr.mxu0 0.0
    %542 = vmatpush1.msra.mxu0 0.0
    %543 = vmatprep.subr.mxu0 0.0
    %544 = vmatpush1.msra.mxu0 0.0
    %545 = vmatprep.subr.mxu0 0.0
    %546 = vmatpush1.msra.mxu0 0.0
    %547 = vmatprep.subr.mxu0 0.0
    %548 = vmatpush1.msra.mxu0 0.0
    %549 = vmatprep.subr.mxu0 0.0
    %550 = vmatpush1.msra.mxu0 0.0
    %551 = vmatprep.subr.mxu0 0.0
    %552 = vmatpush1.msra.mxu0 0.0
    %553 = vmatprep.subr.mxu0 0.0
    %554 = vmatpush1.msra.mxu0 0.0
    %555 = vmatprep.subr.mxu0 0.0
    %556 = vmatpush1.msra.mxu0 0.0
    %557 = vmatprep.subr.mxu0 0.0
    %558 = vmatpush1.msra.mxu0 0.0
    %559 = vmatprep.subr.mxu0 0.0
    %560 = vmatpush1.msra.mxu0 0.0
    %561 = vmatprep.subr.mxu0 0.0
    %562 = vmatpush1.msra.mxu0 0.0
    %563 = vmatprep.subr.mxu0 0.0
    %564 = vmatpush1.msra.mxu0 0.0
    %565 = vmatprep.subr.mxu0 0.0
    %566 = vmatpush1.msra.mxu0 0.0
    %567 = vmatprep.subr.mxu0 0.0
    %568 = vmatpush1.msra.mxu0 0.0
    %569 = vmatprep.subr.mxu0 0.0
    %570 = vmatpush1.msra.mxu0 0.0
    %571 = vmatprep.subr.mxu0 0.0
    %572 = vmatpush1.msra.mxu0 0.0
    %573 = vmatprep.subr.mxu0 0.0
    %574 = vmatpush1.msra.mxu0 0.0
    %575 = vmatprep.mubr.f32.mxu0 0.0
    %576 = vmatmul.mubr.f32.gmra.mrb[0].mxu0 %v509
    %v577 = vpop.f32.mrb[0].mxu0
    %v578 = vadd.f32 0.0, %v577
    %v579 = vpop.f32.mrb[0].mxu0
    %580 = vdwg.mxu0
    %v581 = vadd.f32 %v444, %v578
    %v582 = vmul.f32 %v581, 0.015625
    %583 = vst [vmem:[#allocation5] sm:$0xf] %v582
    // Predicated region
    $region14: #{tpu_custom_call.1} parent=1 // pred_check
      _
    $region15: #{tpu_custom_call.1} parent=1 // pred_check_branch
      %585 = sbr.rel (0) target = $region17
    $region16: #{tpu_custom_call.1} parent=1 // pred_region
      %s587 = ssub.s32 64, 64
      %588 = vsyncadd [#allocation4], %s587
      %s590 = sshll.u32 [#allocation5], 4
      %s591 = int_to_ptr.vmem [resolvable:$true] %s590
      %593 = dma.vmem_to_hbm [thread:$0]  %s591, 64, %s2, [#allocation4]
    $region17: #{tpu_custom_call.1} parent=1 // pred_fallthru
      _
    // Predicated region
    $region18: #{tpu_custom_call.1} parent=1 // pred_check
      _
    $region19: #{tpu_custom_call.1} parent=1 // pred_check_branch
      %595 = sbr.rel (0) target = $region21
    $region20: #{tpu_custom_call.1} parent=1 // pred_region
      %596 = dma.done [#allocation4], 64
    $region21: #{tpu_custom_call.1} parent=1 // pred_fallthru
      _
    %597 = vsyncpa [#allocation3], 1
    %598 = vsyncpa [#allocation4], 1

</llo_original>
